<compile_context>
chip_gen: v7x
topology: tpu7x:2x2x1
jax: 0.10.0
libtpu: 0.0.40
codegen_flags: <defaults>
</compile_context>

<pallas_src>
import functools

import jax
import jax.numpy as jnp
from jax.experimental import pallas as pl
from jax.experimental.pallas import tpu as pltpu


# ----------------------------- hardware / tiling -----------------------------


def _round_up(x, m):
    return ((x + m - 1) // m) * m


@functools.lru_cache(maxsize=1)
def _tpu_profile():
    """Return (usable physical VMEM bytes per core, chip has 2 TensorCores)."""
    vmem = None
    try:
        info = pltpu.get_tpu_info()
        for attr in ("vmem_capacity_bytes", "vmem_size_bytes", "vmem_bytes"):
            v = getattr(info, attr, None)
            if isinstance(v, int) and v > 0:
                vmem = v
                break
    except Exception:
        vmem = None

    kind = ""
    try:
        kind = jax.devices()[0].device_kind.lower()
    except Exception:
        pass
    two_tc = "v7" in kind

    if vmem is None:
        if ("v5" in kind) or ("v6" in kind):
            vmem = 128 * 1024 * 1024
        else:
            vmem = 64 * 1024 * 1024           # conservative (v7x / unknown)
    if two_tc:
        vmem = min(vmem, 64 * 1024 * 1024)     # v7x: 64 MiB per TensorCore
    vmem = min(vmem, 128 * 1024 * 1024)
    return vmem, two_tc


def _pick_tiles(M, K, N, vmem_bytes, two_tc):
    """Choose (tm, tn, tk). K and N are multiples of 128 (padded at init)."""
    big_vmem = vmem_bytes >= 100 * 1024 * 1024
    # Usable budget for the double-buffered operand tiles (headroom left for
    # Mosaic internal scratch / misc buffers).
    budget = int(vmem_bytes * 0.60)

    # Lane-dense output-feature tile; ragged trailing N block is masked.
    tn = N if N <= 1024 else 1024

    # Reduction tile: keep K whole unless it is very large.  When tiled, the
    # init-time padding guarantees 1024 | K so the K grid axis is never ragged.
    keep_whole_k = 8192 if big_vmem else 4096
    tk = K if K <= keep_whole_k else 1024

    # Row tile: largest MXU-friendly candidate whose double-buffered tiles
    # (X f32 + W bf16 + out f32 + bias) fit the VMEM budget.
    tm_cap = 1024 if big_vmem else 512
    tm = 16
    for cand in (1024, 512, 256, 128, 64, 32, 16):
        if cand > tm_cap:
            continue
        need = 2 * (cand * tk * 4 + tk * tn * 2 + cand * tn * 4 + tn * 4)
        if need <= budget:
            tm = cand
            break
    tm = min(tm, _round_up(M, 16))

    # v7x megacore: make sure both TensorCores get at least one grid step.
    if two_tc and pl.cdiv(M, tm) * pl.cdiv(N, tn) < 2 and M > 16:
        tm = max(16, _round_up(pl.cdiv(M, 2), 16))
    return tm, tn, tk


# ----------------------------- Pallas kernels --------------------------------


def _linear_kernel(x_ref, w_ref, b_ref, o_ref):
    # x_ref: (tm, K) f32 (cast to bf16 on the VPU, hidden under the MXU)
    # w_ref: (K, tn) bf16   b_ref: (1, tn) f32   o_ref: (tm, tn) f32
    acc = jnp.dot(
        x_ref[...].astype(jnp.bfloat16), w_ref[...],
        preferred_element_type=jnp.float32,
    )
    o_ref[...] = (acc + b_ref[...]).astype(o_ref.dtype)


def _linear_kernel_kred(x_ref, w_ref, b_ref, o_ref):
    # Large-K variant: grid axis 2 walks K chunks; accumulate directly into the
    # resident f32 output block (bias-init at k == 0, no scratch / finalize).
    @pl.when(pl.program_id(2) == 0)
    def _():
        o_ref[...] = (jnp.zeros_like(o_ref) + b_ref[...]).astype(o_ref.dtype)

    o_ref[...] += jnp.dot(
        x_ref[...].astype(jnp.bfloat16), w_ref[...],
        preferred_element_type=jnp.float32,
    ).astype(o_ref.dtype)


def _linear_pallas(x2d, w, b2d):
    """y = x2d @ w + b2d with bf16 operands on the MXU, f32 accumulation."""
    M, K = x2d.shape
    K2, N = w.shape
    assert K == K2 and b2d.shape == (1, N)
    assert K % 128 == 0 and N % 128 == 0

    vmem_bytes, two_tc = _tpu_profile()
    vmem_limit = int(vmem_bytes * 0.75)      # ~96 MiB on v5e/v6e, ~48 MiB on v7x
    tm, tn, tk = _pick_tiles(M, K, N, vmem_bytes, two_tc)
    grid_m = pl.cdiv(M, tm)                  # ragged trailing row block: masked
    grid_n = pl.cdiv(N, tn)                  # ragged trailing col block: masked

    out_shape = jax.ShapeDtypeStruct((M, N), jnp.float32)

    if tk == K:
        # Single MXU matmul per (row tile, col tile).  Pick the grid order so
        # the operand held across the inner loop is the one that would
        # otherwise be redundantly re-streamed.
        x_bytes = M * K * x2d.dtype.itemsize
        w_bytes = K * N * w.dtype.itemsize
        n_outer = (grid_m > 1 and grid_n > 1
                   and (grid_n - 1) * x_bytes < (grid_m - 1) * w_bytes)
        if n_outer:                           # hold the W column tile, stream X
            grid = (grid_n, grid_m)
            x_map = lambda j, i: (i, 0)
            w_map = lambda j, i: (0, j)       # also the bias map
            o_map = lambda j, i: (i, j)
        else:                                 # hold the X row tile, stream W
            grid = (grid_m, grid_n)
            x_map = lambda i, j: (i, 0)
            w_map = lambda i, j: (0, j)
            o_map = lambda i, j: (i, j)
        return pl.pallas_call(
            _linear_kernel,
            out_shape=out_shape,
            grid_spec=pltpu.PrefetchScalarGridSpec(
                num_scalar_prefetch=0,
                grid=grid,
                in_specs=[
                    pl.BlockSpec((tm, K), x_map),    # X row tile (f32)
                    pl.BlockSpec((K, tn), w_map),    # W col tile (bf16)
                    pl.BlockSpec((1, tn), w_map),    # bias tile (f32)
                ],
                out_specs=pl.BlockSpec((tm, tn), o_map),
            ),
            compiler_params=pltpu.CompilerParams(
                dimension_semantics=("parallel", "parallel"),
                vmem_limit_bytes=vmem_limit,
            ),
        )(x2d, w, b2d)

    # Large-K path: innermost reduction grid axis ("arbitrary"), accumulate
    # into the resident output block.
    grid_k = K // tk                          # exact: K padded to 1024-multiple
    return pl.pallas_call(
        _linear_kernel_kred,
        out_shape=out_shape,
        grid_spec=pltpu.PrefetchScalarGridSpec(
            num_scalar_prefetch=0,
            grid=(grid_m, grid_n, grid_k),
            in_specs=[
                pl.BlockSpec((tm, tk), lambda i, j, k: (i, k)),
                pl.BlockSpec((tk, tn), lambda i, j, k: (k, j)),
                pl.BlockSpec((1, tn), lambda i, j, k: (0, j)),
            ],
            out_specs=pl.BlockSpec((tm, tn), lambda i, j, k: (i, j)),
        ),
        compiler_params=pltpu.CompilerParams(
            dimension_semantics=("parallel", "parallel", "arbitrary"),
            vmem_limit_bytes=vmem_limit,
        ),
    )(x2d, w, b2d)


# ----------------------------- forward (jitted) -------------------------------


@functools.partial(jax.jit, static_argnums=(3, 4))
def _vision_forward(x, w, b2d, patch_size, f):
    B, S, D = x.shape
    sp = S // patch_size
    f_pad = w.shape[0]
    # 'b (s p) d -> b s (p d)' == contiguous (row-major) reshape
    x2d = x.reshape(B * sp, patch_size * D).astype(jnp.float32)
    if f_pad != f:
        # K (reduction) padding must be explicit zeros - not maskable in-kernel.
        x2d = jnp.pad(x2d, ((0, 0), (0, f_pad - f)))
    y2d = _linear_pallas(x2d, w, b2d)
    if f_pad != f:
        # NOTE: for f % 128 != 0 this slice is an extra HBM pass over Y; fold it
        # into the consumer if the padded layout can be carried downstream.
        y2d = y2d[:, :f]
    return y2d.reshape(B, sp, f)


# ----------------------------- Vision module ----------------------------------


class VisionPallas:
    """JAX/Pallas equivalent of mortm Vision(d_spect, patch_size, dropout)."""

    def __init__(self, d_spect, patch_size, dropout, key):
        self.d_spect = d_spect
        self.patch_size = patch_size
        self.dropout = dropout  # inference mode: dropout is identity
        # TODO(synk): training-mode dropout (pltpu.prng_*) not implemented; eval semantics only.

        f = d_spect * patch_size
        self.f = f
        f_pad = _round_up(f, 128)
        if f_pad > 4096:
            # Very large feature dim: the kernel may tile the reduction axis
            # with tk = 1024, so pad K/N so the K grid axis is never ragged.
            f_pad = _round_up(f, 1024)

        kw, kb = jax.random.split(key)
        # torch.nn.Linear default init: U(-1/sqrt(in), 1/sqrt(in))
        bound = 1.0 / (f ** 0.5)
        w_torch = jax.random.uniform(kw, (f, f), jnp.float32, -bound, bound)  # (out, in)
        b = jax.random.uniform(kb, (f,), jnp.float32, -bound, bound)

        w = w_torch.T  # (in, out) = (K, N)
        if f_pad != f:
            w = jnp.pad(w, ((0, f_pad - f), (0, f_pad - f)))
            b = jnp.pad(b, (0, f_pad - f))

        # bf16 weights for the MXU; bias kept f32 for the f32 accumulate + add.
        self.w = w.astype(jnp.bfloat16)                 # (K_pad, N_pad)
        self.b2d = b.reshape(1, f_pad).astype(jnp.float32)

    def __call__(self, x):
        B, S, D = x.shape
        p = self.patch_size
        assert S % p == 0, f"Input length {S} must be divisible by patch size {p}"
        assert D == self.d_spect
        return _vision_forward(x, self.w, self.b2d, p, self.f)


# --------------------------------- main ----------------------------------------


if __name__ == "__main__":
    key = jax.random.PRNGKey(0)
    k_param, k_x = jax.random.split(key)

    # Small shapes consistent with the module: B=2, S=8, d_spect=32, patch_size=4
    B, S, d_spect, patch_size = 2, 8, 32, 4
    x = jax.random.normal(k_x, (B, S, d_spect), jnp.float32)

    vision = VisionPallas(d_spect, patch_size, dropout=0.1, key=k_param)

    y = vision(x)
    y = jax.block_until_ready(y)

    f = d_spect * patch_size
    sp = S // patch_size
    assert y.shape == (B, sp, f)

    # Reference with the same bf16 operands / f32 accumulation (tight check).
    x2d = x.reshape(B * sp, f)
    y_ref_bf16 = (
        jnp.dot(x2d.astype(jnp.bfloat16), vision.w, preferred_element_type=jnp.float32)
        + vision.b2d
    ).reshape(B, sp, f)
    assert jnp.allclose(y, y_ref_bf16, atol=1e-3, rtol=1e-3)

    # Sanity check against the full-precision f32 reference (loose tolerance
    # because operands are bf16 on the MXU).
    w_f32 = vision.w.astype(jnp.float32)
    y_ref_f32 = (x2d @ w_f32 + vision.b2d).reshape(B, sp, f)
    assert jnp.allclose(y, y_ref_f32, atol=5e-2, rtol=5e-2)

    print("KERNEL_OK")
</pallas_src>

<mosaic_0001>
module attributes {stable_mosaic.version = 11 : i64} {
  func.func @_linear_kernel(%arg0: i32, %arg1: i32, %arg2: memref<16x128xf32, #tpu.memory_space<vmem>>, %arg3: memref<128x128xbf16, #tpu.memory_space<vmem>>, %arg4: memref<1x128xf32, #tpu.memory_space<vmem>>, %arg5: memref<16x128xf32, #tpu.memory_space<vmem>>) attributes {dimension_semantics = [#tpu.dimension_semantics<parallel>, #tpu.dimension_semantics<parallel>], iteration_bounds = array<i64: 1, 1>, scalar_prefetch = 0 : i64, scratch_operands = 0 : i64, tpu.core_type = #tpu.core_type<tc>, window_params = [{transform_indices = @transform_0, window_bounds = array<i64: 16, 128>}, {transform_indices = @transform_1, window_bounds = array<i64: 128, 128>}, {transform_indices = @transform_2, window_bounds = array<i64: 1, 128>}, {transform_indices = @transform_3, window_bounds = array<i64: 16, 128>}]} {
    %c0 = arith.constant 0 : index
    %c0_0 = arith.constant 0 : index
    %0 = vector.load %arg2[%c0, %c0_0] : memref<16x128xf32, #tpu.memory_space<vmem>>, vector<16x128xf32>
    %1 = arith.truncf %0 : vector<16x128xf32> to vector<16x128xbf16>
    %c0_1 = arith.constant 0 : index
    %c0_2 = arith.constant 0 : index
    %2 = vector.load %arg3[%c0_1, %c0_2] : memref<128x128xbf16, #tpu.memory_space<vmem>>, vector<128x128xbf16>
    %cst = arith.constant dense<0.000000e+00> : vector<16x128xf32>
    %3 = tpu.matmul %1, %2, %cst {dimension_numbers = #tpu.dot_dimension_numbers<[1], [0], [0], [1], [0, 0, 1, 1], [], []>} : vector<16x128xbf16>, vector<128x128xbf16>, vector<16x128xf32> -> vector<16x128xf32>
    %c0_3 = arith.constant 0 : index
    %c0_4 = arith.constant 0 : index
    %4 = vector.load %arg4[%c0_3, %c0_4] : memref<1x128xf32, #tpu.memory_space<vmem>>, vector<1x128xf32>
    %5 = vector.broadcast %4 : vector<1x128xf32> to vector<16x128xf32>
    %6 = arith.addf %3, %5 : vector<16x128xf32>
    %c0_5 = arith.constant 0 : index
    %c0_6 = arith.constant 0 : index
    %7 = vector.load %arg5[%c0_5, %c0_6] : memref<16x128xf32, #tpu.memory_space<vmem>>, vector<16x128xf32>
    tpu.vector_store %arg5[%c0_5, %c0_6], %6 {strides = array<i32>} : memref<16x128xf32, #tpu.memory_space<vmem>>, vector<16x128xf32>,
    return
  }
  func.func @transform_0(%arg0: i32, %arg1: i32) -> (i32, i32) {
    %c0_i32 = arith.constant 0 : i32
    %c0_i32_0 = arith.constant 0 : i32
    return %arg0, %c0_i32 : i32, i32
  }
  func.func @transform_1(%arg0: i32, %arg1: i32) -> (i32, i32) {
    %c0_i32 = arith.constant 0 : i32
    %c0_i32_0 = arith.constant 0 : i32
    return %c0_i32, %arg1 : i32, i32
  }
  func.func @transform_2(%arg0: i32, %arg1: i32) -> (i32, i32) {
    %c0_i32 = arith.constant 0 : i32
    %c0_i32_0 = arith.constant 0 : i32
    return %c0_i32, %arg1 : i32, i32
  }
  func.func @transform_3(%arg0: i32, %arg1: i32) -> (i32, i32) {
    %c0_i32 = arith.constant 0 : i32
    return %arg0, %arg1 : i32, i32
  }
}

</mosaic_0001>

<llo_original>
// kernel: _vision_forward.1
$region0: #{_vision_forward.1}
  #allocation0 [shape = 'u32[]', space=smem, size = 0x4, offset = 0x4, fixed_abs, tag = 'smem constant byte address 0x4 - core index']
  #allocation1 [shape = 'u32[144,128]{1,0:T(1,128)}', space=vmem, size = 0x12000, scoped, tag = 'internal scratch']
  %s0 = inlined_call_operand.vmem [shape: f32[4,128], index: 0, kind: input, shape index: {}]
  %s1 = inlined_call_operand.hbm [shape: bf16[128,128], index: 1, kind: input, shape index: {}]
  %s2 = inlined_call_operand.vmem [shape: f32[1,128], index: 2, kind: input, shape index: {}]
  %s3 = inlined_call_operand.hbm [shape: f32[4,128], index: 3, kind: output, shape index: {}]
  %s4 = sld [smem:[#allocation0]]
  $region26: #{_vision_forward.1} parent=0
    _
  %s6 = ssub.s32 1, %s4
  %s7 = scalar_select 0, %s6, %s4
  $region1: #{_vision_forward.1} parent=0
    #allocation2 [shape = 'u8[32768]{0}', space=vmem, size = 0x8000, scoped, tag = 'input window, operand 1, single buffered']
    #allocation3 [shape = 's32[1]{0}', space=sflag, size = 0x4, scoped, tag = 'scoped memory for _vision_forward.1']
    #allocation4 [shape = 's32[1]{0}', space=sflag, size = 0x4, scoped, tag = 'scoped memory for _vision_forward.1']
    #allocation5 [shape = 'u8[8192]{0}', space=vmem, size = 0x2000, scoped, tag = 'output window, operand 0, single buffered']
    %8 = vsyncpa [#allocation3], 0
    %9 = vsyncpa [#allocation4], 0
    // Predicated region
    $region2: #{_vision_forward.1} parent=1 // pred_check
      _
    $region3: #{_vision_forward.1} parent=1 // pred_check_branch
      %11 = sbr.rel (0) target = $region5
    $region4: #{_vision_forward.1} parent=1 // pred_region
      _
    $region5: #{_vision_forward.1} parent=1 // pred_fallthru
      _
    // Predicated region
    $region6: #{_vision_forward.1} parent=1 // pred_check
      _
    $region7: #{_vision_forward.1} parent=1 // pred_check_branch
      %13 = sbr.rel (0) target = $region9
    $region8: #{_vision_forward.1} parent=1 // pred_region
      %s15 = ssub.s32 1024, 1024
      %16 = vsyncadd [#allocation3], %s15
      %s17 = sshll.u32 [#allocation2], 4
      %s18 = int_to_ptr.vmem [resolvable:$true] %s17
      %23 = dma.hbm_to_vmem [thread:$0]  %s1, 1024, %s18, [#allocation3], 64, 64, 4
    $region9: #{_vision_forward.1} parent=1 // pred_fallthru
      _
    // Predicated region
    $region10: #{_vision_forward.1} parent=1 // pred_check
      _
    $region11: #{_vision_forward.1} parent=1 // pred_check_branch
      %25 = sbr.rel (0) target = $region13
    $region12: #{_vision_forward.1} parent=1 // pred_region
      _
    $region13: #{_vision_forward.1} parent=1 // pred_fallthru
      _
    // Predicated region
    $region14: #{_vision_forward.1} parent=1 // pred_check
      _
    $region15: #{_vision_forward.1} parent=1 // pred_check_branch
      %27 = sbr.rel (0) target = $region17
    $region16: #{_vision_forward.1} parent=1 // pred_region
      %28 = dma.done [#allocation3], 1024
    $region17: #{_vision_forward.1} parent=1 // pred_fallthru
      _
    %v30 = vld [vmem:[%s0] sm:$0xff]
    %v31 = vld [vmem:[%s0 + $0x8] sm:$0xff]
    %v32 = vpack.c.bf16 %v31, %v30
    %v33 = vld [vmem:[#allocation2] sm:$0xf]
    %v34 = vld [vmem:[#allocation2 + $0x4] sm:$0xf]
    %v35 = vld [vmem:[#allocation2 + $0x8] sm:$0xf]
    %v36 = vld [vmem:[#allocation2 + $0xc] sm:$0xf]
    %v37 = vld [vmem:[#allocation2 + $0x10] sm:$0xf]
    %v38 = vld [vmem:[#allocation2 + $0x14] sm:$0xf]
    %v39 = vld [vmem:[#allocation2 + $0x18] sm:$0xf]
    %v40 = vld [vmem:[#allocation2 + $0x1c] sm:$0xf]
    %v41 = vld [vmem:[#allocation2 + $0x20] sm:$0xf]
    %v42 = vld [vmem:[#allocation2 + $0x24] sm:$0xf]
    %v43 = vld [vmem:[#allocation2 + $0x28] sm:$0xf]
    %v44 = vld [vmem:[#allocation2 + $0x2c] sm:$0xf]
    %v45 = vld [vmem:[#allocation2 + $0x30] sm:$0xf]
    %v46 = vld [vmem:[#allocation2 + $0x34] sm:$0xf]
    %v47 = vld [vmem:[#allocation2 + $0x38] sm:$0xf]
    %v48 = vld [vmem:[#allocation2 + $0x3c] sm:$0xf]
    %v49 = vld [vmem:[%s2] sm:$0x1]
    %v51 = vlaneseq
    %v52 = vshrl.u32 %v51, 7
    %v53 = vsub.s32 0, %v52
    %v54 = vrot.slane %v49, %v53
    %v72 = vunpack.c.l.b16 %v33
    %v73 = vunpack.c.l.b16 %v34
    %v74 = vunpack.c.l.b16 %v35
    %v75 = vunpack.c.l.b16 %v36
    %v76 = vunpack.c.l.b16 %v37
    %v77 = vunpack.c.l.b16 %v38
    %v78 = vunpack.c.l.b16 %v39
    %v79 = vunpack.c.l.b16 %v40
    %v80 = vunpack.c.l.b16 %v41
    %v81 = vunpack.c.l.b16 %v42
    %v82 = vunpack.c.l.b16 %v43
    %v83 = vunpack.c.l.b16 %v44
    %v84 = vunpack.c.l.b16 %v45
    %v85 = vunpack.c.l.b16 %v46
    %v86 = vunpack.c.l.b16 %v47
    %v87 = vunpack.c.l.b16 %v48
    %v88 = vpack.c.b16 %v73, %v72
    %v89 = vpack.c.b16 %v75, %v74
    %v90 = vpack.c.b16 %v77, %v76
    %v91 = vpack.c.b16 %v79, %v78
    %v92 = vpack.c.b16 %v81, %v80
    %v93 = vpack.c.b16 %v83, %v82
    %v94 = vpack.c.b16 %v85, %v84
    %v95 = vpack.c.b16 %v87, %v86
    %104 = vmatprep.subr.bf16.mxu0 0
    %105 = vmatpush1.bf16.msra.mxu0 %v88
    %106 = vmatprep.subr.bf16.mxu0 0
    %107 = vmatpush1.bf16.msra.mxu0 %v89
    %108 = vmatprep.subr.bf16.mxu0 0
    %109 = vmatpush1.bf16.msra.mxu0 %v90
    %110 = vmatprep.subr.bf16.mxu0 0
    %111 = vmatpush1.bf16.msra.mxu0 %v91
    %112 = vmatprep.subr.bf16.mxu0 0
    %113 = vmatpush1.bf16.msra.mxu0 %v92
    %114 = vmatprep.subr.bf16.mxu0 0
    %115 = vmatpush1.bf16.msra.mxu0 %v93
    %116 = vmatprep.subr.bf16.mxu0 0
    %117 = vmatpush1.bf16.msra.mxu0 %v94
    %118 = vmatprep.subr.bf16.mxu0 0
    %119 = vmatpush1.bf16.msra.mxu0 %v95
    %120 = vmatprep.subr.bf16.mxu0 0
    %121 = vmatpush1.bf16.msra.mxu0 0
    %122 = vmatprep.subr.bf16.mxu0 0
    %123 = vmatpush1.bf16.msra.mxu0 0
    %124 = vmatprep.subr.bf16.mxu0 0
    %125 = vmatpush1.bf16.msra.mxu0 0
    %126 = vmatprep.subr.bf16.mxu0 0
    %127 = vmatpush1.bf16.msra.mxu0 0
    %128 = vmatprep.subr.bf16.mxu0 0
    %129 = vmatpush1.bf16.msra.mxu0 0
    %130 = vmatprep.subr.bf16.mxu0 0
    %131 = vmatpush1.bf16.msra.mxu0 0
    %132 = vmatprep.subr.bf16.mxu0 0
    %133 = vmatpush1.bf16.msra.mxu0 0
    %134 = vmatprep.subr.bf16.mxu0 0
    %135 = vmatpush1.bf16.msra.mxu0 0
    %136 = vmatprep.mubr.bf16.mxu0 0
    %137 = vmatmul.mubr.bf16.gmra.mrb[0].mxu0 %v32
    %v138 = vpop.f32.mrb[0].mxu0
    %v139 = vadd.f32 %v54, %v138
    %v140 = vpop.f32.mrb[0].mxu0
    %v141 = vpop.f32.mrb[0].mxu0
    %v142 = vadd.f32 %v54, %v141
    %v143 = vpop.f32.mrb[0].mxu0
    %144 = vdwg.mxu0
    %145 = vst [vmem:[#allocation5] sm:$0xff] %v139
    %146 = vst [vmem:[#allocation5 + $0x8] sm:$0xff] %v142
    // Predicated region
    $region18: #{_vision_forward.1} parent=1 // pred_check
      _
    $region19: #{_vision_forward.1} parent=1 // pred_check_branch
      %148 = sbr.rel (0) target = $region21
    $region20: #{_vision_forward.1} parent=1 // pred_region
      %s150 = ssub.s32 256, 64
      %151 = vsyncadd [#allocation4], %s150
      %s152 = sshll.u32 [#allocation5], 4
      %s153 = int_to_ptr.vmem [resolvable:$true] %s152
      %158 = dma.vmem_to_hbm [thread:$0]  %s153, 64, %s3, [#allocation4], 64, 64, 4
    $region21: #{_vision_forward.1} parent=1 // pred_fallthru
      _
    // Predicated region
    $region22: #{_vision_forward.1} parent=1 // pred_check
      _
    $region23: #{_vision_forward.1} parent=1 // pred_check_branch
      %160 = sbr.rel (0) target = $region25
    $region24: #{_vision_forward.1} parent=1 // pred_region
      %161 = dma.done [#allocation4], 256
    $region25: #{_vision_forward.1} parent=1 // pred_fallthru
      _
    %162 = vsyncpa [#allocation3], 1
    %163 = vsyncpa [#allocation4], 1

</llo_original>
